<compile_context>
chip_gen: v6e
topology: v6e:2x2x1
jax: 0.10.0
libtpu: 0.0.40
codegen_flags: <defaults>
</compile_context>

<pallas_src>
import functools

import jax
import jax.numpy as jnp
from jax import lax
from jax.experimental import pallas as pl
from jax.experimental.pallas import tpu as pltpu

CLASS_NUM = 19
IGNORE_LABEL = 255


def _xded_kernel(x_ref, gt_ref, sums_ref, counts_ref, lse_ref, *,
                 num_classes, inv_t, tile_n, n_valid, need_mask):
    """Per-block per-class logit sums, counts and per-class sums of lse."""
    i = pl.program_id(0)
    x = x_ref[...].astype(jnp.float32)               # (TN, C) pixel-major
    gt = gt_ref[...]                                  # (1, TN) int32
    tn = x.shape[0]
    c = num_classes

    # Pixels contribute iff their label is a real class (255 etc. -> 0).
    in_range = jnp.logical_and(gt >= 0, gt < c)       # (1, TN)

    if need_mask:
        # Ragged last tile: out-of-range rows/cols hold DMA garbage.  Zero
        # the logit rows (0 * NaN = NaN would poison the matmul) and drop
        # the columns from the one-hot / validity mask.
        col = i * tile_n + lax.broadcasted_iota(jnp.int32, (1, tn), 1)
        in_range = jnp.logical_and(in_range, col < n_valid)
        row = i * tile_n + lax.broadcasted_iota(jnp.int32, (tn, 1), 0)
        x = jnp.where(row < n_valid, x, 0.0)

    # Lane-dense class-major one-hot (C, TN): per-class sums via one MXU
    # matmul, per-class counts via a cheap lane reduction.
    cls = lax.broadcasted_iota(jnp.int32, (c, tn), 0)
    onehot = jnp.where(jnp.logical_and(gt == cls, in_range), 1.0, 0.0)

    sums = lax.dot_general(onehot, x, (((1,), (0,)), ((), ())),
                           preferred_element_type=jnp.float32)      # (C, C)
    counts = jnp.sum(onehot, axis=1, keepdims=True)                 # (C, 1)

    # Per-pixel logsumexp(x / T).  Invalid pixels are excluded by contracting
    # against the (already masked) one-hot, so the lane-major validity mask
    # never needs a sublane<->lane relayout.
    mx = jnp.max(x, axis=1, keepdims=True)                          # (TN, 1)
    e = jnp.exp((x - mx) * inv_t)                                   # (TN, C)
    se = jnp.sum(e, axis=1, keepdims=True)                          # (TN, 1)
    lse = mx * inv_t + jnp.log(se)                                  # (TN, 1)
    lse_c = lax.dot_general(onehot, lse, (((1,), (0,)), ((), ())),
                            preferred_element_type=jnp.float32)     # (C, 1)

    sums_ref[0] = sums
    counts_ref[0] = counts
    lse_ref[0] = lse_c


def _round_up(v, m):
    return ((v + m - 1) // m) * m


def pixelwise_xded_loss(main_out, gts, temp_factor=2.0, tile_n=65536):
    """Pallas implementation of pixelwise_XDEDLoss.forward."""
    c = CLASS_NUM
    flat_out = main_out.reshape(-1, c)                # (N, C), no cast / pad
    n = flat_out.shape[0]
    gt_row = gts.reshape(1, n).astype(jnp.int32)      # (1, N) lane-major labels

    # Tile policy: multiples of 256 (MXU-friendly, satisfies the (8,128)
    # rule).  Inputs that fit in one tile use a single full-array block, so
    # neither the divisibility constraint nor ragged masking applies.
    tile_cap = max(256, _round_up(min(int(tile_n), 65536), 256))
    if n <= tile_cap:
        tile, nblocks = n, 1
    else:
        tile, nblocks = tile_cap, pl.cdiv(n, tile_cap)
    need_mask = (n % tile) != 0

    temp = float(temp_factor)
    inv_t = 1.0 / temp

    kernel = functools.partial(
        _xded_kernel, num_classes=c, inv_t=inv_t, tile_n=tile,
        n_valid=n, need_mask=need_mask)

    sums_blk, counts_blk, lse_blk = pl.pallas_call(
        kernel,
        out_shape=(jax.ShapeDtypeStruct((nblocks, c, c), jnp.float32),
                   jax.ShapeDtypeStruct((nblocks, c, 1), jnp.float32),
                   jax.ShapeDtypeStruct((nblocks, c, 1), jnp.float32)),
        grid=(nblocks,),
        in_specs=[pl.BlockSpec((tile, c), lambda i: (i, 0)),
                  pl.BlockSpec((1, tile), lambda i: (0, i))],
        out_specs=(pl.BlockSpec((1, c, c), lambda i: (i, 0, 0)),
                   pl.BlockSpec((1, c, 1), lambda i: (i, 0, 0)),
                   pl.BlockSpec((1, c, 1), lambda i: (i, 0, 0))),
        compiler_params=pltpu.CompilerParams(
            dimension_semantics=("parallel",),
            vmem_limit_bytes=(48 * 1024 * 1024) if tile >= 32768 else None),
    )(flat_out, gt_row)

    # O(C^2) epilogue (tiny XLA ops): class means, target softmax, entropies.
    sums = jnp.sum(sums_blk, axis=0)                  # (C, C) rows = gt class
    counts = jnp.sum(counts_blk, axis=0)[:, 0]        # (C,)
    lse_total = jnp.sum(lse_blk)                      # sum of lse over valid px
    means = sums / jnp.maximum(counts, 1.0)[:, None]  # empty classes -> 0 (unused)
    logq = jax.nn.log_softmax(means * inv_t, axis=1)  # per-class target log-probs
    q = jnp.exp(logq)
    neg_entropy = jnp.sum(counts * jnp.sum(q * logq, axis=1))  # -sum_g count_g*H_g
    cross = inv_t * jnp.sum(q * sums)                 # sum_g <q_g, sums_g> / T
    total_kl = lse_total + neg_entropy - cross
    # * temp_factor**2 / input.size(0)   (input.size(0) == N pixels)
    return total_kl * (temp ** 2) / n


def reference_loss(main_out, gts, temp_factor=2.0):
    """Pure-JAX reference mirroring the PyTorch module."""
    c = CLASS_NUM
    x = main_out.reshape(-1, c).astype(jnp.float32)
    g = gts.reshape(-1).astype(jnp.int32)
    onehot = jax.nn.one_hot(g, c, dtype=jnp.float32)   # 255 -> all zeros
    sums = onehot.T @ x
    counts = jnp.sum(onehot, axis=0)
    means = sums / jnp.maximum(counts, 1.0)[:, None]
    sel = onehot @ means
    target = jnp.where((g == IGNORE_LABEL)[:, None], x, sel)
    log_p = jax.nn.log_softmax(x / temp_factor, axis=1)
    log_q = jax.nn.log_softmax(target / temp_factor, axis=1)
    kl = jnp.sum(jnp.exp(log_q) * (log_q - log_p))
    return kl * temp_factor ** 2 / x.shape[0]


if __name__ == "__main__":
    key = jax.random.PRNGKey(0)
    k1, k2, k3, k4, k5, k6 = jax.random.split(key, 6)

    # Main check: single full-array block (no masking path).
    B, H, W = 2, 16, 16
    main_out = jax.random.normal(k1, (B, H, W, CLASS_NUM), dtype=jnp.float32)
    gts = jax.random.randint(k2, (B, H, W), 0, CLASS_NUM, dtype=jnp.int32)
    gts = jnp.where(jax.random.bernoulli(k3, 0.1, (B, H, W)), IGNORE_LABEL, gts)

    loss = pixelwise_xded_loss(main_out, gts, temp_factor=2.0)
    loss = jax.block_until_ready(loss)
    ref = reference_loss(main_out, gts, temp_factor=2.0)
    assert jnp.allclose(loss, ref, rtol=2e-3, atol=1e-4), (loss, ref)

    # Second check: multi-block grid with a ragged last tile (masking path).
    B2, H2, W2 = 1, 24, 20            # N = 480, not a multiple of the 256 tile
    main_out2 = jax.random.normal(k4, (B2, H2, W2, CLASS_NUM), dtype=jnp.float32)
    gts2 = jax.random.randint(k5, (B2, H2, W2), 0, CLASS_NUM, dtype=jnp.int32)
    gts2 = jnp.where(jax.random.bernoulli(k6, 0.1, (B2, H2, W2)),
                     IGNORE_LABEL, gts2)
    loss2 = jax.block_until_ready(
        pixelwise_xded_loss(main_out2, gts2, temp_factor=2.0, tile_n=128))
    ref2 = reference_loss(main_out2, gts2, temp_factor=2.0)
    assert jnp.allclose(loss2, ref2, rtol=2e-3, atol=1e-4), (loss2, ref2)

    print("KERNEL_OK")
</pallas_src>

<mosaic_0001>
module attributes {stable_mosaic.version = 11 : i64} {
  func.func @_xded_kernel(%arg0: i32, %arg1: memref<512x19xf32, #tpu.memory_space<vmem>>, %arg2: memref<1x512xi32, #tpu.memory_space<vmem>>, %arg3: memref<1x19x19xf32, #tpu.memory_space<vmem>>, %arg4: memref<1x19x1xf32, #tpu.memory_space<vmem>>, %arg5: memref<1x19x1xf32, #tpu.memory_space<vmem>>) attributes {dimension_semantics = [#tpu.dimension_semantics<parallel>], iteration_bounds = array<i64: 1>, scalar_prefetch = 0 : i64, scratch_operands = 0 : i64, tpu.core_type = #tpu.core_type<tc>, window_params = [{transform_indices = @transform_0, window_bounds = array<i64: 512, 19>}, {transform_indices = @transform_1, window_bounds = array<i64: 1, 512>}, {transform_indices = @transform_2, window_bounds = array<i64: 1, 19, 19>}, {transform_indices = @transform_3, window_bounds = array<i64: 1, 19, 1>}, {transform_indices = @transform_4, window_bounds = array<i64: 1, 19, 1>}]} {
    %c0 = arith.constant 0 : index
    %c0_0 = arith.constant 0 : index
    %0 = vector.load %arg1[%c0, %c0_0] : memref<512x19xf32, #tpu.memory_space<vmem>>, vector<512x19xf32>
    %c0_1 = arith.constant 0 : index
    %c0_2 = arith.constant 0 : index
    %1 = vector.load %arg2[%c0_1, %c0_2] : memref<1x512xi32, #tpu.memory_space<vmem>>, vector<1x512xi32>
    %c0_i32 = arith.constant 0 : i32
    %2 = vector.broadcast %c0_i32 : i32 to vector<1x512xi32>
    %3 = arith.cmpi sge, %1, %2 : vector<1x512xi32>
    %c19_i32 = arith.constant 19 : i32
    %4 = vector.broadcast %c19_i32 : i32 to vector<1x512xi32>
    %5 = arith.cmpi slt, %1, %4 : vector<1x512xi32>
    %6 = arith.andi %3, %5 : vector<1x512xi1>
    %7 = tpu.iota {dimensions = array<i32: 0>} : vector<19x512xi32>
    %8 = vector.broadcast %1 : vector<1x512xi32> to vector<19x512xi32>
    %9 = arith.cmpi eq, %8, %7 : vector<19x512xi32>
    %10 = vector.broadcast %6 : vector<1x512xi1> to vector<19x512xi1>
    %11 = arith.andi %9, %10 : vector<19x512xi1>
    %cst = arith.constant 1.000000e+00 : f32
    %cst_3 = arith.constant 0.000000e+00 : f32
    %12 = vector.broadcast %cst : f32 to vector<19x512xf32>
    %13 = vector.broadcast %cst_3 : f32 to vector<19x512xf32>
    %14 = arith.select %11, %12, %13 : vector<19x512xi1>, vector<19x512xf32>
    %cst_4 = arith.constant dense<0.000000e+00> : vector<19x19xf32>
    %15 = tpu.matmul %14, %0, %cst_4 {dimension_numbers = #tpu.dot_dimension_numbers<[1], [0], [0], [1], [0, 0, 1, 1], [], []>} : vector<19x512xf32>, vector<512x19xf32>, vector<19x19xf32> -> vector<19x19xf32>
    %cst_5 = arith.constant dense<0.000000e+00> : vector<19xf32>
    %16 = vector.multi_reduction <add>, %14, %cst_5 [1] : vector<19x512xf32> to vector<19xf32>
    %17 = vector.shape_cast %16 : vector<19xf32> to vector<19x1xf32>
    %cst_6 = arith.constant dense<0xFF800000> : vector<512xf32>
    %18 = vector.multi_reduction <maximumf>, %0, %cst_6 [1] : vector<512x19xf32> to vector<512xf32>
    %19 = vector.shape_cast %18 : vector<512xf32> to vector<512x1xf32>
    %20 = vector.broadcast %19 : vector<512x1xf32> to vector<512x19xf32>
    %21 = arith.subf %0, %20 : vector<512x19xf32>
    %cst_7 = arith.constant 5.000000e-01 : f32
    %22 = vector.broadcast %cst_7 : f32 to vector<512x19xf32>
    %23 = arith.mulf %21, %22 : vector<512x19xf32>
    %24 = math.exp %23 : vector<512x19xf32>
    %cst_8 = arith.constant dense<0.000000e+00> : vector<512xf32>
    %25 = vector.multi_reduction <add>, %24, %cst_8 [1] : vector<512x19xf32> to vector<512xf32>
    %26 = vector.shape_cast %25 : vector<512xf32> to vector<512x1xf32>
    %cst_9 = arith.constant 5.000000e-01 : f32
    %27 = vector.broadcast %cst_9 : f32 to vector<512x1xf32>
    %28 = arith.mulf %19, %27 : vector<512x1xf32>
    %29 = math.log %26 : vector<512x1xf32>
    %30 = arith.addf %28, %29 : vector<512x1xf32>
    %cst_10 = arith.constant dense<0.000000e+00> : vector<19x1xf32>
    %31 = tpu.matmul %14, %30, %cst_10 {dimension_numbers = #tpu.dot_dimension_numbers<[1], [0], [0], [1], [0, 0, 1, 1], [], []>} : vector<19x512xf32>, vector<512x1xf32>, vector<19x1xf32> -> vector<19x1xf32>
    %c0_11 = arith.constant 0 : index
    %c0_12 = arith.constant 0 : index
    %c0_13 = arith.constant 0 : index
    %32 = vector.load %arg3[%c0_11, %c0_12, %c0_13] : memref<1x19x19xf32, #tpu.memory_space<vmem>>, vector<1x19x19xf32>
    %33 = vector.shape_cast %32 : vector<1x19x19xf32> to vector<19x19xf32>
    %34 = vector.shape_cast %15 : vector<19x19xf32> to vector<1x19x19xf32>
    tpu.vector_store %arg3[%c0_11, %c0_12, %c0_13], %34 {strides = array<i32>} : memref<1x19x19xf32, #tpu.memory_space<vmem>>, vector<1x19x19xf32>,
    %c0_14 = arith.constant 0 : index
    %c0_15 = arith.constant 0 : index
    %c0_16 = arith.constant 0 : index
    %35 = vector.load %arg4[%c0_14, %c0_15, %c0_16] : memref<1x19x1xf32, #tpu.memory_space<vmem>>, vector<1x19x1xf32>
    %36 = vector.shape_cast %35 : vector<1x19x1xf32> to vector<19x1xf32>
    %37 = vector.shape_cast %17 : vector<19x1xf32> to vector<1x19x1xf32>
    tpu.vector_store %arg4[%c0_14, %c0_15, %c0_16], %37 {strides = array<i32>} : memref<1x19x1xf32, #tpu.memory_space<vmem>>, vector<1x19x1xf32>,
    %c0_17 = arith.constant 0 : index
    %c0_18 = arith.constant 0 : index
    %c0_19 = arith.constant 0 : index
    %38 = vector.load %arg5[%c0_17, %c0_18, %c0_19] : memref<1x19x1xf32, #tpu.memory_space<vmem>>, vector<1x19x1xf32>
    %39 = vector.shape_cast %38 : vector<1x19x1xf32> to vector<19x1xf32>
    %40 = vector.shape_cast %31 : vector<19x1xf32> to vector<1x19x1xf32>
    tpu.vector_store %arg5[%c0_17, %c0_18, %c0_19], %40 {strides = array<i32>} : memref<1x19x1xf32, #tpu.memory_space<vmem>>, vector<1x19x1xf32>,
    return
  }
  func.func @transform_0(%arg0: i32) -> (i32, i32) {
    %c0_i32 = arith.constant 0 : i32
    %c0_i32_0 = arith.constant 0 : i32
    return %arg0, %c0_i32 : i32, i32
  }
  func.func @transform_1(%arg0: i32) -> (i32, i32) {
    %c0_i32 = arith.constant 0 : i32
    %c0_i32_0 = arith.constant 0 : i32
    return %c0_i32, %arg0 : i32, i32
  }
  func.func @transform_2(%arg0: i32) -> (i32, i32, i32) {
    %c0_i32 = arith.constant 0 : i32
    %c0_i32_0 = arith.constant 0 : i32
    %c0_i32_1 = arith.constant 0 : i32
    return %arg0, %c0_i32, %c0_i32_0 : i32, i32, i32
  }
  func.func @transform_3(%arg0: i32) -> (i32, i32, i32) {
    %c0_i32 = arith.constant 0 : i32
    %c0_i32_0 = arith.constant 0 : i32
    %c0_i32_1 = arith.constant 0 : i32
    return %arg0, %c0_i32, %c0_i32_0 : i32, i32, i32
  }
  func.func @transform_4(%arg0: i32) -> (i32, i32, i32) {
    %c0_i32 = arith.constant 0 : i32
    %c0_i32_0 = arith.constant 0 : i32
    %c0_i32_1 = arith.constant 0 : i32
    return %arg0, %c0_i32, %c0_i32_0 : i32, i32, i32
  }
}

</mosaic_0001>

<llo_original>
// kernel: tpu_custom_call.1
$region0: #{tpu_custom_call.1}
  #allocation0 [shape = 'u32[]', space=smem, size = 0x4, offset = 0x4, fixed_abs, tag = 'smem constant byte address 0x4 - core index']
  #allocation1 [shape = 'u32[144,128]{1,0:T(1,128)}', space=vmem, size = 0x12000, scoped, tag = 'internal scratch']
  %s0 = inlined_call_operand.vmem [shape: f32[512,19], index: 0, kind: input, shape index: {}]
  %s1 = inlined_call_operand.vmem [shape: s32[1,512], index: 1, kind: input, shape index: {}]
  %s2 = inlined_call_operand.vmem [shape: f32[1,19,19], index: 2, kind: output, shape index: {0}]
  %s3 = inlined_call_operand.vmem [shape: f32[1,19,1], index: 3, kind: output, shape index: {1}]
  %s4 = inlined_call_operand.vmem [shape: f32[1,19,1], index: 4, kind: output, shape index: {2}]
  %5 = xla_tuple %s2, %s3, %s4
  %s6 = sld [smem:[#allocation0]]
  $region34: #{tpu_custom_call.1} parent=0
    _
  %s8 = ssub.s32 1, %s6
  %s9 = scalar_select 0, %s8, %s6
  // Predicated region
  $region2: #{tpu_custom_call.1} parent=0 // pred_check
    _
  $region3: #{tpu_custom_call.1} parent=0 // pred_check_branch
    %11 = sbr.rel (0) target = $region5
  $region4: #{tpu_custom_call.1} parent=0 // pred_region
    _
  $region5: #{tpu_custom_call.1} parent=0 // pred_fallthru
    _
  // Predicated region
  $region6: #{tpu_custom_call.1} parent=0 // pred_check
    _
  $region7: #{tpu_custom_call.1} parent=0 // pred_check_branch
    %13 = sbr.rel (0) target = $region9
  $region8: #{tpu_custom_call.1} parent=0 // pred_region
    _
  $region9: #{tpu_custom_call.1} parent=0 // pred_fallthru
    _
  %v14 = vld [vmem:[%s0] sm:$0xff]
  %v15 = vld [vmem:[%s0 + $0x8] sm:$0xff]
  %v16 = vld [vmem:[%s0 + $0x10] sm:$0xff]
  %v17 = vld [vmem:[%s0 + $0x18] sm:$0xff]
  %v18 = vld [vmem:[%s0 + $0x20] sm:$0xff]
  %v19 = vld [vmem:[%s0 + $0x28] sm:$0xff]
  %v20 = vld [vmem:[%s0 + $0x30] sm:$0xff]
  %v21 = vld [vmem:[%s0 + $0x38] sm:$0xff]
  %v22 = vld [vmem:[%s0 + $0x40] sm:$0xff]
  %v23 = vld [vmem:[%s0 + $0x48] sm:$0xff]
  %v24 = vld [vmem:[%s0 + $0x50] sm:$0xff]
  %v25 = vld [vmem:[%s0 + $0x58] sm:$0xff]
  %v26 = vld [vmem:[%s0 + $0x60] sm:$0xff]
  %v27 = vld [vmem:[%s0 + $0x68] sm:$0xff]
  %v28 = vld [vmem:[%s0 + $0x70] sm:$0xff]
  %v29 = vld [vmem:[%s0 + $0x78] sm:$0xff]
  %v30 = vld [vmem:[%s0 + $0x80] sm:$0xff]
  %v31 = vld [vmem:[%s0 + $0x88] sm:$0xff]
  %v32 = vld [vmem:[%s0 + $0x90] sm:$0xff]
  %v33 = vld [vmem:[%s0 + $0x98] sm:$0xff]
  %v34 = vld [vmem:[%s0 + $0xa0] sm:$0xff]
  %v35 = vld [vmem:[%s0 + $0xa8] sm:$0xff]
  %v36 = vld [vmem:[%s0 + $0xb0] sm:$0xff]
  %v37 = vld [vmem:[%s0 + $0xb8] sm:$0xff]
  %v38 = vld [vmem:[%s0 + $0xc0] sm:$0xff]
  %v39 = vld [vmem:[%s0 + $0xc8] sm:$0xff]
  %v40 = vld [vmem:[%s0 + $0xd0] sm:$0xff]
  %v41 = vld [vmem:[%s0 + $0xd8] sm:$0xff]
  %v42 = vld [vmem:[%s0 + $0xe0] sm:$0xff]
  %v43 = vld [vmem:[%s0 + $0xe8] sm:$0xff]
  %v44 = vld [vmem:[%s0 + $0xf0] sm:$0xff]
  %v45 = vld [vmem:[%s0 + $0xf8] sm:$0xff]
  %v46 = vld [vmem:[%s0 + $0x100] sm:$0xff]
  %v47 = vld [vmem:[%s0 + $0x108] sm:$0xff]
  %v48 = vld [vmem:[%s0 + $0x110] sm:$0xff]
  %v49 = vld [vmem:[%s0 + $0x118] sm:$0xff]
  %v50 = vld [vmem:[%s0 + $0x120] sm:$0xff]
  %v51 = vld [vmem:[%s0 + $0x128] sm:$0xff]
  %v52 = vld [vmem:[%s0 + $0x130] sm:$0xff]
  %v53 = vld [vmem:[%s0 + $0x138] sm:$0xff]
  %v54 = vld [vmem:[%s0 + $0x140] sm:$0xff]
  %v55 = vld [vmem:[%s0 + $0x148] sm:$0xff]
  %v56 = vld [vmem:[%s0 + $0x150] sm:$0xff]
  %v57 = vld [vmem:[%s0 + $0x158] sm:$0xff]
  %v58 = vld [vmem:[%s0 + $0x160] sm:$0xff]
  %v59 = vld [vmem:[%s0 + $0x168] sm:$0xff]
  %v60 = vld [vmem:[%s0 + $0x170] sm:$0xff]
  %v61 = vld [vmem:[%s0 + $0x178] sm:$0xff]
  %v62 = vld [vmem:[%s0 + $0x180] sm:$0xff]
  %v63 = vld [vmem:[%s0 + $0x188] sm:$0xff]
  %v64 = vld [vmem:[%s0 + $0x190] sm:$0xff]
  %v65 = vld [vmem:[%s0 + $0x198] sm:$0xff]
  %v66 = vld [vmem:[%s0 + $0x1a0] sm:$0xff]
  %v67 = vld [vmem:[%s0 + $0x1a8] sm:$0xff]
  %v68 = vld [vmem:[%s0 + $0x1b0] sm:$0xff]
  %v69 = vld [vmem:[%s0 + $0x1b8] sm:$0xff]
  %v70 = vld [vmem:[%s0 + $0x1c0] sm:$0xff]
  %v71 = vld [vmem:[%s0 + $0x1c8] sm:$0xff]
  %v72 = vld [vmem:[%s0 + $0x1d0] sm:$0xff]
  %v73 = vld [vmem:[%s0 + $0x1d8] sm:$0xff]
  %v74 = vld [vmem:[%s0 + $0x1e0] sm:$0xff]
  %v75 = vld [vmem:[%s0 + $0x1e8] sm:$0xff]
  %v76 = vld [vmem:[%s0 + $0x1f0] sm:$0xff]
  %v77 = vld [vmem:[%s0 + $0x1f8] sm:$0xff]
  %v78 = vld [vmem:[%s1] sm:$0xf]
  %vm79 = vcmp.ge.s32.totalorder %v78, 0
  %vm80 = vcmp.lt.s32.totalorder %v78, 19
  %vm81 = vmand %vm79, %vm80
  %v82 = vlaneseq
  %v83 = vshrl.u32 %v82, 7
  %v84 = vadd.s32 %v83, 8
  %v85 = vadd.s32 %v83, 16
  %v86 = vlaneseq
  %v87 = vshrl.u32 %v86, 7
  %v88 = vsub.s32 0, %v87
  %v89 = vrot.slane %v78, %v88
  %v90 = vlaneseq
  %v91 = vshrl.u32 %v90, 7
  %v92 = vsub.s32 1, %v91
  %v93 = vrot.slane %v78, %v92
  %v94 = vlaneseq
  %v95 = vshrl.u32 %v94, 7
  %v96 = vsub.s32 2, %v95
  %v97 = vrot.slane %v78, %v96
  %v98 = vlaneseq
  %v99 = vshrl.u32 %v98, 7
  %v100 = vsub.s32 3, %v99
  %v101 = vrot.slane %v78, %v100
  %vm102 = vcmp.eq.s32.totalorder %v89, %v83
  %vm103 = vcmp.eq.s32.totalorder %v93, %v83
  %vm104 = vcmp.eq.s32.totalorder %v97, %v83
  %vm105 = vcmp.eq.s32.totalorder %v101, %v83
  %vm106 = vcmp.eq.s32.totalorder %v89, %v84
  %vm107 = vcmp.eq.s32.totalorder %v93, %v84
  %vm108 = vcmp.eq.s32.totalorder %v97, %v84
  %vm109 = vcmp.eq.s32.totalorder %v101, %v84
  %vm110 = vcmp.eq.s32.totalorder %v89, %v85
  %vm111 = vcmp.eq.s32.totalorder %v93, %v85
  %vm112 = vcmp.eq.s32.totalorder %v97, %v85
  %vm113 = vcmp.eq.s32.totalorder %v101, %v85
  %v114 = vsel %vm81, 1, 0
  %v115 = vlaneseq
  %v116 = vshrl.u32 %v115, 7
  %v117 = vsub.s32 0, %v116
  %v118 = vrot.slane %v114, %v117
  %v119 = vlaneseq
  %v120 = vshrl.u32 %v119, 7
  %v121 = vsub.s32 1, %v120
  %v122 = vrot.slane %v114, %v121
  %v123 = vlaneseq
  %v124 = vshrl.u32 %v123, 7
  %v125 = vsub.s32 2, %v124
  %v126 = vrot.slane %v114, %v125
  %v127 = vlaneseq
  %v128 = vshrl.u32 %v127, 7
  %v129 = vsub.s32 3, %v128
  %v130 = vrot.slane %v114, %v129
  %vm131 = vcmp.eq.s32.totalorder %v118, 1
  %vm132 = vcmp.eq.s32.totalorder %v122, 1
  %vm133 = vcmp.eq.s32.totalorder %v126, 1
  %vm134 = vcmp.eq.s32.totalorder %v130, 1
  %vm135 = vmand %vm102, %vm131
  %vm136 = vmand %vm103, %vm132
  %vm137 = vmand %vm104, %vm133
  %vm138 = vmand %vm105, %vm134
  %vm139 = vmand %vm106, %vm131
  %vm140 = vmand %vm107, %vm132
  %vm141 = vmand %vm108, %vm133
  %vm142 = vmand %vm109, %vm134
  %vm143 = vmand %vm110, %vm131
  %vm144 = vmand %vm111, %vm132
  %vm145 = vmand %vm112, %vm133
  %vm146 = vmand %vm113, %vm134
  %v147 = vsel %vm135, 1.0, 0.0
  %v148 = vsel %vm136, 1.0, 0.0
  %v149 = vsel %vm137, 1.0, 0.0
  %v150 = vsel %vm138, 1.0, 0.0
  %v151 = vsel %vm139, 1.0, 0.0
  %v152 = vsel %vm140, 1.0, 0.0
  %v153 = vsel %vm141, 1.0, 0.0
  %v154 = vsel %vm142, 1.0, 0.0
  %v155 = vsel %vm143, 1.0, 0.0
  %v156 = vsel %vm144, 1.0, 0.0
  %v157 = vsel %vm145, 1.0, 0.0
  %v158 = vsel %vm146, 1.0, 0.0
  %159 = vmatprep.subr.mxu0 0.0
  %160 = vmatpush1.msra.mxu0 %v29
  %161 = vmatprep.subr.mxu0 0.0
  %162 = vmatpush1.msra.mxu0 %v28
  %163 = vmatprep.subr.mxu0 0.0
  %164 = vmatpush1.msra.mxu0 %v27
  %165 = vmatprep.subr.mxu0 0.0
  %166 = vmatpush1.msra.mxu0 %v26
  %167 = vmatprep.subr.mxu0 0.0
  %168 = vmatpush1.msra.mxu0 %v25
  %169 = vmatprep.subr.mxu0 0.0
  %170 = vmatpush1.msra.mxu0 %v24
  %171 = vmatprep.subr.mxu0 0.0
  %172 = vmatpush1.msra.mxu0 %v23
  %173 = vmatprep.subr.mxu0 0.0
  %174 = vmatpush1.msra.mxu0 %v22
  %175 = vmatprep.subr.mxu0 0.0
  %176 = vmatpush1.msra.mxu0 %v21
  %177 = vmatprep.subr.mxu0 0.0
  %178 = vmatpush1.msra.mxu0 %v20
  %179 = vmatprep.subr.mxu0 0.0
  %180 = vmatpush1.msra.mxu0 %v19
  %181 = vmatprep.subr.mxu0 0.0
  %182 = vmatpush1.msra.mxu0 %v18
  %183 = vmatprep.subr.mxu0 0.0
  %184 = vmatpush1.msra.mxu0 %v17
  %185 = vmatprep.subr.mxu0 0.0
  %186 = vmatpush1.msra.mxu0 %v16
  %187 = vmatprep.subr.mxu0 0.0
  %188 = vmatpush1.msra.mxu0 %v15
  %189 = vmatprep.subr.mxu0 0.0
  %190 = vmatpush1.msra.mxu0 %v14
  %191 = vmatprep.subr.mxu0 0.0
  %192 = vmatpush2.msra.mxu0 %v45
  %193 = vmatprep.subr.mxu0 0.0
  %194 = vmatpush2.msra.mxu0 %v44
  %195 = vmatprep.subr.mxu0 0.0
  %196 = vmatpush2.msra.mxu0 %v43
  %197 = vmatprep.subr.mxu0 0.0
  %198 = vmatpush2.msra.mxu0 %v42
  %199 = vmatprep.subr.mxu0 0.0
  %200 = vmatpush2.msra.mxu0 %v41
  %201 = vmatprep.subr.mxu0 0.0
  %202 = vmatpush2.msra.mxu0 %v40
  %203 = vmatprep.subr.mxu0 0.0
  %204 = vmatpush2.msra.mxu0 %v39
  %205 = vmatprep.subr.mxu0 0.0
  %206 = vmatpush2.msra.mxu0 %v38
  %207 = vmatprep.subr.mxu0 0.0
  %208 = vmatpush2.msra.mxu0 %v37
  %209 = vmatprep.subr.mxu0 0.0
  %210 = vmatpush2.msra.mxu0 %v36
  %211 = vmatprep.subr.mxu0 0.0
  %212 = vmatpush2.msra.mxu0 %v35
  %213 = vmatprep.subr.mxu0 0.0
  %214 = vmatpush2.msra.mxu0 %v34
  %215 = vmatprep.subr.mxu0 0.0
  %216 = vmatpush2.msra.mxu0 %v33
  %217 = vmatprep.subr.mxu0 0.0
  %218 = vmatpush2.msra.mxu0 %v32
  %219 = vmatprep.subr.mxu0 0.0
  %220 = vmatpush2.msra.mxu0 %v31
  %221 = vmatprep.subr.mxu0 0.0
  %222 = vmatpush2.msra.mxu0 %v30
  %223 = vmatprep.mubr.f32.mxu0 %v148
  %224 = vmatmul.mubr.f32.gmra.mxu0 %v147
  %v225 = vpop.f32.mrf.mxu0
  %v226 = vadd.f32 0.0, %v225
  %v227 = vpop.f32.mrf.mxu0
  %228 = vmatprep.mubr.f32.mxu0 %v152
  %229 = vmatmul.mubr.f32.gmra.mxu0 %v151
  %v230 = vpop.f32.mrf.mxu0
  %v231 = vadd.f32 0.0, %v230
  %v232 = vpop.f32.mrf.mxu0
  %233 = vmatprep.mubr.f32.mxu0 %v156
  %234 = vmatmul.mubr.f32.gmra.mxu0 %v155
  %v235 = vpop.f32.mrf.mxu0
  %v236 = vadd.f32 0.0, %v235
  %v237 = vpop.f32.mrf.mxu0
  %238 = vdwg.mxu0
  %239 = vmatprep.subr.mxu0 0.0
  %240 = vmatpush1.msra.mxu0 %v61
  %241 = vmatprep.subr.mxu0 0.0
  %242 = vmatpush1.msra.mxu0 %v60
  %243 = vmatprep.subr.mxu0 0.0
  %244 = vmatpush1.msra.mxu0 %v59
  %245 = vmatprep.subr.mxu0 0.0
  %246 = vmatpush1.msra.mxu0 %v58
  %247 = vmatprep.subr.mxu0 0.0
  %248 = vmatpush1.msra.mxu0 %v57
  %249 = vmatprep.subr.mxu0 0.0
  %250 = vmatpush1.msra.mxu0 %v56
  %251 = vmatprep.subr.mxu0 0.0
  %252 = vmatpush1.msra.mxu0 %v55
  %253 = vmatprep.subr.mxu0 0.0
  %254 = vmatpush1.msra.mxu0 %v54
  %255 = vmatprep.subr.mxu0 0.0
  %256 = vmatpush1.msra.mxu0 %v53
  %257 = vmatprep.subr.mxu0 0.0
  %258 = vmatpush1.msra.mxu0 %v52
  %259 = vmatprep.subr.mxu0 0.0
  %260 = vmatpush1.msra.mxu0 %v51
  %261 = vmatprep.subr.mxu0 0.0
  %262 = vmatpush1.msra.mxu0 %v50
  %263 = vmatprep.subr.mxu0 0.0
  %264 = vmatpush1.msra.mxu0 %v49
  %265 = vmatprep.subr.mxu0 0.0
  %266 = vmatpush1.msra.mxu0 %v48
  %267 = vmatprep.subr.mxu0 0.0
  %268 = vmatpush1.msra.mxu0 %v47
  %269 = vmatprep.subr.mxu0 0.0
  %270 = vmatpush1.msra.mxu0 %v46
  %271 = vmatprep.subr.mxu0 0.0
  %272 = vmatpush2.msra.mxu0 %v77
  %273 = vmatprep.subr.mxu0 0.0
  %274 = vmatpush2.msra.mxu0 %v76
  %275 = vmatprep.subr.mxu0 0.0
  %276 = vmatpush2.msra.mxu0 %v75
  %277 = vmatprep.subr.mxu0 0.0
  %278 = vmatpush2.msra.mxu0 %v74
  %279 = vmatprep.subr.mxu0 0.0
  %280 = vmatpush2.msra.mxu0 %v73
  %281 = vmatprep.subr.mxu0 0.0
  %282 = vmatpush2.msra.mxu0 %v72
  %283 = vmatprep.subr.mxu0 0.0
  %284 = vmatpush2.msra.mxu0 %v71
  %285 = vmatprep.subr.mxu0 0.0
  %286 = vmatpush2.msra.mxu0 %v70
  %287 = vmatprep.subr.mxu0 0.0
  %288 = vmatpush2.msra.mxu0 %v69
  %289 = vmatprep.subr.mxu0 0.0
  %290 = vmatpush2.msra.mxu0 %v68
  %291 = vmatprep.subr.mxu0 0.0
  %292 = vmatpush2.msra.mxu0 %v67
  %293 = vmatprep.subr.mxu0 0.0
  %294 = vmatpush2.msra.mxu0 %v66
  %295 = vmatprep.subr.mxu0 0.0
  %296 = vmatpush2.msra.mxu0 %v65
  %297 = vmatprep.subr.mxu0 0.0
  %298 = vmatpush2.msra.mxu0 %v64
  %299 = vmatprep.subr.mxu0 0.0
  %300 = vmatpush2.msra.mxu0 %v63
  %301 = vmatprep.subr.mxu0 0.0
  %302 = vmatpush2.msra.mxu0 %v62
  %303 = vmatprep.mubr.f32.mxu0 %v150
  %304 = vmatmul.mubr.f32.gmra.mxu0 %v149
  %v305 = vpop.f32.mrf.mxu0
  %v306 = vadd.f32 %v226, %v305
  %v307 = vpop.f32.mrf.mxu0
  %308 = vmatprep.mubr.f32.mxu0 %v154
  %309 = vmatmul.mubr.f32.gmra.mxu0 %v153
  %v310 = vpop.f32.mrf.mxu0
  %v311 = vadd.f32 %v231, %v310
  %v312 = vpop.f32.mrf.mxu0
  %313 = vmatprep.mubr.f32.mxu0 %v158
  %314 = vmatmul.mubr.f32.gmra.mxu0 %v157
  %v315 = vpop.f32.mrf.mxu0
  %v316 = vadd.f32 %v236, %v315
  %v317 = vpop.f32.mrf.mxu0
  %318 = vdwg.mxu0
  %v319 = vadd.f32 %v147, %v148
  %v320 = vadd.f32 %v319, %v149
  %v321 = vadd.f32 %v320, %v150
  %322 = vadd.xlane.f32.xlu0 %v321
  %v323 = vpop.xlane.xlu0 %322
  %v324 = vadd.f32 %v151, %v152
  %v325 = vadd.f32 %v324, %v153
  %v326 = vadd.f32 %v325, %v154
  %327 = vadd.xlane.f32.xlu0 %v326
  %v328 = vpop.xlane.xlu0 %327
  %vm329 = vcmask 1042432
  %v330 = vsel %vm329, %v155, 0.0
  %v331 = vsel %vm329, %v156, 0.0
  %v332 = vadd.f32 %v330, %v331
  %v333 = vsel %vm329, %v157, 0.0
  %v334 = vadd.f32 %v332, %v333
  %v335 = vsel %vm329, %v158, 0.0
  %v336 = vadd.f32 %v334, %v335
  %337 = vadd.xlane.f32.xlu0 %v336
  %v338 = vpop.xlane.xlu0 %337
  %vm339 = vcmask 154624
  %v340 = vsel %vm339, %v14, -inf
  %341 = vmax.xlane.f32.xlu0 %v340
  %v342 = vpop.xlane.xlu0 %341
  %v343 = vsel %vm339, %v15, -inf
  %344 = vmax.xlane.f32.xlu0 %v343
  %v345 = vpop.xlane.xlu0 %344
  %v346 = vsel %vm339, %v16, -inf
  %347 = vmax.xlane.f32.xlu0 %v346
  %v348 = vpop.xlane.xlu0 %347
  %v349 = vsel %vm339, %v17, -inf
  %350 = vmax.xlane.f32.xlu0 %v349
  %v351 = vpop.xlane.xlu0 %350
  %v352 = vsel %vm339, %v18, -inf
  %353 = vmax.xlane.f32.xlu0 %v352
  %v354 = vpop.xlane.xlu0 %353
  %v355 = vsel %vm339, %v19, -inf
  %356 = vmax.xlane.f32.xlu0 %v355
  %v357 = vpop.xlane.xlu0 %356
  %v358 = vsel %vm339, %v20, -inf
  %359 = vmax.xlane.f32.xlu0 %v358
  %v360 = vpop.xlane.xlu0 %359
  %v361 = vsel %vm339, %v21, -inf
  %362 = vmax.xlane.f32.xlu0 %v361
  %v363 = vpop.xlane.xlu0 %362
  %v364 = vsel %vm339, %v22, -inf
  %365 = vmax.xlane.f32.xlu0 %v364
  %v366 = vpop.xlane.xlu0 %365
  %v367 = vsel %vm339, %v23, -inf
  %368 = vmax.xlane.f32.xlu0 %v367
  %v369 = vpop.xlane.xlu0 %368
  %v370 = vsel %vm339, %v24, -inf
  %371 = vmax.xlane.f32.xlu0 %v370
  %v372 = vpop.xlane.xlu0 %371
  %v373 = vsel %vm339, %v25, -inf
  %374 = vmax.xlane.f32.xlu0 %v373
  %v375 = vpop.xlane.xlu0 %374
  %v376 = vsel %vm339, %v26, -inf
  %377 = vmax.xlane.f32.xlu0 %v376
  %v378 = vpop.xlane.xlu0 %377
  %v379 = vsel %vm339, %v27, -inf
  %380 = vmax.xlane.f32.xlu0 %v379
  %v381 = vpop.xlane.xlu0 %380
  %v382 = vsel %vm339, %v28, -inf
  %383 = vmax.xlane.f32.xlu0 %v382
  %v384 = vpop.xlane.xlu0 %383
  %v385 = vsel %vm339, %v29, -inf
  %386 = vmax.xlane.f32.xlu0 %v385
  %v387 = vpop.xlane.xlu0 %386
  %v388 = vsel %vm339, %v30, -inf
  %389 = vmax.xlane.f32.xlu0 %v388
  %v390 = vpop.xlane.xlu0 %389
  %v391 = vsel %vm339, %v31, -inf
  %392 = vmax.xlane.f32.xlu0 %v391
  %v393 = vpop.xlane.xlu0 %392
  %v394 = vsel %vm339, %v32, -inf
  %395 = vmax.xlane.f32.xlu0 %v394
  %v396 = vpop.xlane.xlu0 %395
  %v397 = vsel %vm339, %v33, -inf
  %398 = vmax.xlane.f32.xlu0 %v397
  %v399 = vpop.xlane.xlu0 %398
  %v400 = vsel %vm339, %v34, -inf
  %401 = vmax.xlane.f32.xlu0 %v400
  %v402 = vpop.xlane.xlu0 %401
  %v403 = vsel %vm339, %v35, -inf
  %404 = vmax.xlane.f32.xlu0 %v403
  %v405 = vpop.xlane.xlu0 %404
  %v406 = vsel %vm339, %v36, -inf
  %407 = vmax.xlane.f32.xlu0 %v406
  %v408 = vpop.xlane.xlu0 %407
  %v409 = vsel %vm339, %v37, -inf
  %410 = vmax.xlane.f32.xlu0 %v409
  %v411 = vpop.xlane.xlu0 %410
  %v412 = vsel %vm339, %v38, -inf
  %413 = vmax.xlane.f32.xlu0 %v412
  %v414 = vpop.xlane.xlu0 %413
  %v415 = vsel %vm339, %v39, -inf
  %416 = vmax.xlane.f32.xlu0 %v415
  %v417 = vpop.xlane.xlu0 %416
  %v418 = vsel %vm339, %v40, -inf
  %419 = vmax.xlane.f32.xlu0 %v418
  %v420 = vpop.xlane.xlu0 %419
  %v421 = vsel %vm339, %v41, -inf
  %422 = vmax.xlane.f32.xlu0 %v421
  %v423 = vpop.xlane.xlu0 %422
  %v424 = vsel %vm339, %v42, -inf
  %425 = vmax.xlane.f32.xlu0 %v424
  %v426 = vpop.xlane.xlu0 %425
  %v427 = vsel %vm339, %v43, -inf
  %428 = vmax.xlane.f32.xlu0 %v427
  %v429 = vpop.xlane.xlu0 %428
  %v430 = vsel %vm339, %v44, -inf
  %431 = vmax.xlane.f32.xlu0 %v430
  %v432 = vpop.xlane.xlu0 %431
  %v433 = vsel %vm339, %v45, -inf
  %434 = vmax.xlane.f32.xlu0 %v433
  %v435 = vpop.xlane.xlu0 %434
  %v436 = vsel %vm339, %v46, -inf
  %437 = vmax.xlane.f32.xlu0 %v436
  %v438 = vpop.xlane.xlu0 %437
  %v439 = vsel %vm339, %v47, -inf
  %440 = vmax.xlane.f32.xlu0 %v439
  %v441 = vpop.xlane.xlu0 %440
  %v442 = vsel %vm339, %v48, -inf
  %443 = vmax.xlane.f32.xlu0 %v442
  %v444 = vpop.xlane.xlu0 %443
  %v445 = vsel %vm339, %v49, -inf
  %446 = vmax.xlane.f32.xlu0 %v445
  %v447 = vpop.xlane.xlu0 %446
  %v448 = vsel %vm339, %v50, -inf
  %449 = vmax.xlane.f32.xlu0 %v448
  %v450 = vpop.xlane.xlu0 %449
  %v451 = vsel %vm339, %v51, -inf
  %452 = vmax.xlane.f32.xlu0 %v451
  %v453 = vpop.xlane.xlu0 %452
  %v454 = vsel %vm339, %v52, -inf
  %455 = vmax.xlane.f32.xlu0 %v454
  %v456 = vpop.xlane.xlu0 %455
  %v457 = vsel %vm339, %v53, -inf
  %458 = vmax.xlane.f32.xlu0 %v457
  %v459 = vpop.xlane.xlu0 %458
  %v460 = vsel %vm339, %v54, -inf
  %461 = vmax.xlane.f32.xlu0 %v460
  %v462 = vpop.xlane.xlu0 %461
  %v463 = vsel %vm339, %v55, -inf
  %464 = vmax.xlane.f32.xlu0 %v463
  %v465 = vpop.xlane.xlu0 %464
  %v466 = vsel %vm339, %v56, -inf
  %467 = vmax.xlane.f32.xlu0 %v466
  %v468 = vpop.xlane.xlu0 %467
  %v469 = vsel %vm339, %v57, -inf
  %470 = vmax.xlane.f32.xlu0 %v469
  %v471 = vpop.xlane.xlu0 %470
  %v472 = vsel %vm339, %v58, -inf
  %473 = vmax.xlane.f32.xlu0 %v472
  %v474 = vpop.xlane.xlu0 %473
  %v475 = vsel %vm339, %v59, -inf
  %476 = vmax.xlane.f32.xlu0 %v475
  %v477 = vpop.xlane.xlu0 %476
  %v478 = vsel %vm339, %v60, -inf
  %479 = vmax.xlane.f32.xlu0 %v478
  %v480 = vpop.xlane.xlu0 %479
  %v481 = vsel %vm339, %v61, -inf
  %482 = vmax.xlane.f32.xlu0 %v481
  %v483 = vpop.xlane.xlu0 %482
  %v484 = vsel %vm339, %v62, -inf
  %485 = vmax.xlane.f32.xlu0 %v484
  %v486 = vpop.xlane.xlu0 %485
  %v487 = vsel %vm339, %v63, -inf
  %488 = vmax.xlane.f32.xlu0 %v487
  %v489 = vpop.xlane.xlu0 %488
  %v490 = vsel %vm339, %v64, -inf
  %491 = vmax.xlane.f32.xlu0 %v490
  %v492 = vpop.xlane.xlu0 %491
  %v493 = vsel %vm339, %v65, -inf
  %494 = vmax.xlane.f32.xlu0 %v493
  %v495 = vpop.xlane.xlu0 %494
  %v496 = vsel %vm339, %v66, -inf
  %497 = vmax.xlane.f32.xlu0 %v496
  %v498 = vpop.xlane.xlu0 %497
  %v499 = vsel %vm339, %v67, -inf
  %500 = vmax.xlane.f32.xlu0 %v499
  %v501 = vpop.xlane.xlu0 %500
  %v502 = vsel %vm339, %v68, -inf
  %503 = vmax.xlane.f32.xlu0 %v502
  %v504 = vpop.xlane.xlu0 %503
  %v505 = vsel %vm339, %v69, -inf
  %506 = vmax.xlane.f32.xlu0 %v505
  %v507 = vpop.xlane.xlu0 %506
  %v508 = vsel %vm339, %v70, -inf
  %509 = vmax.xlane.f32.xlu0 %v508
  %v510 = vpop.xlane.xlu0 %509
  %v511 = vsel %vm339, %v71, -inf
  %512 = vmax.xlane.f32.xlu0 %v511
  %v513 = vpop.xlane.xlu0 %512
  %v514 = vsel %vm339, %v72, -inf
  %515 = vmax.xlane.f32.xlu0 %v514
  %v516 = vpop.xlane.xlu0 %515
  %v517 = vsel %vm339, %v73, -inf
  %518 = vmax.xlane.f32.xlu0 %v517
  %v519 = vpop.xlane.xlu0 %518
  %v520 = vsel %vm339, %v74, -inf
  %521 = vmax.xlane.f32.xlu0 %v520
  %v522 = vpop.xlane.xlu0 %521
  %v523 = vsel %vm339, %v75, -inf
  %524 = vmax.xlane.f32.xlu0 %v523
  %v525 = vpop.xlane.xlu0 %524
  %v526 = vsel %vm339, %v76, -inf
  %527 = vmax.xlane.f32.xlu0 %v526
  %v528 = vpop.xlane.xlu0 %527
  %v529 = vsel %vm339, %v77, -inf
  %530 = vmax.xlane.f32.xlu0 %v529
  %v531 = vpop.xlane.xlu0 %530
  %v532 = vsub.f32 %v14, %v342
  %v533 = vsub.f32 %v15, %v345
  %v534 = vsub.f32 %v16, %v348
  %v535 = vsub.f32 %v17, %v351
  %v536 = vsub.f32 %v18, %v354
  %v537 = vsub.f32 %v19, %v357
  %v538 = vsub.f32 %v20, %v360
  %v539 = vsub.f32 %v21, %v363
  %v540 = vsub.f32 %v22, %v366
  %v541 = vsub.f32 %v23, %v369
  %v542 = vsub.f32 %v24, %v372
  %v543 = vsub.f32 %v25, %v375
  %v544 = vsub.f32 %v26, %v378
  %v545 = vsub.f32 %v27, %v381
  %v546 = vsub.f32 %v28, %v384
  %v547 = vsub.f32 %v29, %v387
  %v548 = vsub.f32 %v30, %v390
  %v549 = vsub.f32 %v31, %v393
  %v550 = vsub.f32 %v32, %v396
  %v551 = vsub.f32 %v33, %v399
  %v552 = vsub.f32 %v34, %v402
  %v553 = vsub.f32 %v35, %v405
  %v554 = vsub.f32 %v36, %v408
  %v555 = vsub.f32 %v37, %v411
  %v556 = vsub.f32 %v38, %v414
  %v557 = vsub.f32 %v39, %v417
  %v558 = vsub.f32 %v40, %v420
  %v559 = vsub.f32 %v41, %v423
  %v560 = vsub.f32 %v42, %v426
  %v561 = vsub.f32 %v43, %v429
  %v562 = vsub.f32 %v44, %v432
  %v563 = vsub.f32 %v45, %v435
  %v564 = vsub.f32 %v46, %v438
  %v565 = vsub.f32 %v47, %v441
  %v566 = vsub.f32 %v48, %v444
  %v567 = vsub.f32 %v49, %v447
  %v568 = vsub.f32 %v50, %v450
  %v569 = vsub.f32 %v51, %v453
  %v570 = vsub.f32 %v52, %v456
  %v571 = vsub.f32 %v53, %v459
  %v572 = vsub.f32 %v54, %v462
  %v573 = vsub.f32 %v55, %v465
  %v574 = vsub.f32 %v56, %v468
  %v575 = vsub.f32 %v57, %v471
  %v576 = vsub.f32 %v58, %v474
  %v577 = vsub.f32 %v59, %v477
  %v578 = vsub.f32 %v60, %v480
  %v579 = vsub.f32 %v61, %v483
  %v580 = vsub.f32 %v62, %v486
  %v581 = vsub.f32 %v63, %v489
  %v582 = vsub.f32 %v64, %v492
  %v583 = vsub.f32 %v65, %v495
  %v584 = vsub.f32 %v66, %v498
  %v585 = vsub.f32 %v67, %v501
  %v586 = vsub.f32 %v68, %v504
  %v587 = vsub.f32 %v69, %v507
  %v588 = vsub.f32 %v70, %v510
  %v589 = vsub.f32 %v71, %v513
  %v590 = vsub.f32 %v72, %v516
  %v591 = vsub.f32 %v73, %v519
  %v592 = vsub.f32 %v74, %v522
  %v593 = vsub.f32 %v75, %v525
  %v594 = vsub.f32 %v76, %v528
  %v595 = vsub.f32 %v77, %v531
  %v596 = vmul.f32 %v532, 0.5
  %v597 = vmul.f32 %v533, 0.5
  %v598 = vmul.f32 %v534, 0.5
  %v599 = vmul.f32 %v535, 0.5
  %v600 = vmul.f32 %v536, 0.5
  %v601 = vmul.f32 %v537, 0.5
  %v602 = vmul.f32 %v538, 0.5
  %v603 = vmul.f32 %v539, 0.5
  %v604 = vmul.f32 %v540, 0.5
  %v605 = vmul.f32 %v541, 0.5
  %v606 = vmul.f32 %v542, 0.5
  %v607 = vmul.f32 %v543, 0.5
  %v608 = vmul.f32 %v544, 0.5
  %v609 = vmul.f32 %v545, 0.5
  %v610 = vmul.f32 %v546, 0.5
  %v611 = vmul.f32 %v547, 0.5
  %v612 = vmul.f32 %v548, 0.5
  %v613 = vmul.f32 %v549, 0.5
  %v614 = vmul.f32 %v550, 0.5
  %v615 = vmul.f32 %v551, 0.5
  %v616 = vmul.f32 %v552, 0.5
  %v617 = vmul.f32 %v553, 0.5
  %v618 = vmul.f32 %v554, 0.5
  %v619 = vmul.f32 %v555, 0.5
  %v620 = vmul.f32 %v556, 0.5
  %v621 = vmul.f32 %v557, 0.5
  %v622 = vmul.f32 %v558, 0.5
  %v623 = vmul.f32 %v559, 0.5
  %v624 = vmul.f32 %v560, 0.5
  %v625 = vmul.f32 %v561, 0.5
  %v626 = vmul.f32 %v562, 0.5
  %v627 = vmul.f32 %v563, 0.5
  %v628 = vmul.f32 %v564, 0.5
  %v629 = vmul.f32 %v565, 0.5
  %v630 = vmul.f32 %v566, 0.5
  %v631 = vmul.f32 %v567, 0.5
  %v632 = vmul.f32 %v568, 0.5
  %v633 = vmul.f32 %v569, 0.5
  %v634 = vmul.f32 %v570, 0.5
  %v635 = vmul.f32 %v571, 0.5
  %v636 = vmul.f32 %v572, 0.5
  %v637 = vmul.f32 %v573, 0.5
  %v638 = vmul.f32 %v574, 0.5
  %v639 = vmul.f32 %v575, 0.5
  %v640 = vmul.f32 %v576, 0.5
  %v641 = vmul.f32 %v577, 0.5
  %v642 = vmul.f32 %v578, 0.5
  %v643 = vmul.f32 %v579, 0.5
  %v644 = vmul.f32 %v580, 0.5
  %v645 = vmul.f32 %v581, 0.5
  %v646 = vmul.f32 %v582, 0.5
  %v647 = vmul.f32 %v583, 0.5
  %v648 = vmul.f32 %v584, 0.5
  %v649 = vmul.f32 %v585, 0.5
  %v650 = vmul.f32 %v586, 0.5
  %v651 = vmul.f32 %v587, 0.5
  %v652 = vmul.f32 %v588, 0.5
  %v653 = vmul.f32 %v589, 0.5
  %v654 = vmul.f32 %v590, 0.5
  %v655 = vmul.f32 %v591, 0.5
  %v656 = vmul.f32 %v592, 0.5
  %v657 = vmul.f32 %v593, 0.5
  %v658 = vmul.f32 %v594, 0.5
  %v659 = vmul.f32 %v595, 0.5
  %v660 = vmul.f32 %v596, 1.442695
  %v661 = vpow.pop %v660
  %v662 = vmul.f32 %v597, 1.442695
  %v663 = vpow.pop %v662
  %v664 = vmul.f32 %v598, 1.442695
  %v665 = vpow.pop %v664
  %v666 = vmul.f32 %v599, 1.442695
  %v667 = vpow.pop %v666
  %v668 = vmul.f32 %v600, 1.442695
  %v669 = vpow.pop %v668
  %v670 = vmul.f32 %v601, 1.442695
  %v671 = vpow.pop %v670
  %v672 = vmul.f32 %v602, 1.442695
  %v673 = vpow.pop %v672
  %v674 = vmul.f32 %v603, 1.442695
  %v675 = vpow.pop %v674
  %v676 = vmul.f32 %v604, 1.442695
  %v677 = vpow.pop %v676
  %v678 = vmul.f32 %v605, 1.442695
  %v679 = vpow.pop %v678
  %v680 = vmul.f32 %v606, 1.442695
  %v681 = vpow.pop %v680
  %v682 = vmul.f32 %v607, 1.442695
  %v683 = vpow.pop %v682
  %v684 = vmul.f32 %v608, 1.442695
  %v685 = vpow.pop %v684
  %v686 = vmul.f32 %v609, 1.442695
  %v687 = vpow.pop %v686
  %v688 = vmul.f32 %v610, 1.442695
  %v689 = vpow.pop %v688
  %v690 = vmul.f32 %v611, 1.442695
  %v691 = vpow.pop %v690
  %v692 = vmul.f32 %v612, 1.442695
  %v693 = vpow.pop %v692
  %v694 = vmul.f32 %v613, 1.442695
  %v695 = vpow.pop %v694
  %v696 = vmul.f32 %v614, 1.442695
  %v697 = vpow.pop %v696
  %v698 = vmul.f32 %v615, 1.442695
  %v699 = vpow.pop %v698
  %v700 = vmul.f32 %v616, 1.442695
  %v701 = vpow.pop %v700
  %v702 = vmul.f32 %v617, 1.442695
  %v703 = vpow.pop %v702
  %v704 = vmul.f32 %v618, 1.442695
  %v705 = vpow.pop %v704
  %v706 = vmul.f32 %v619, 1.442695
  %v707 = vpow.pop %v706
  %v708 = vmul.f32 %v620, 1.442695
  %v709 = vpow.pop %v708
  %v710 = vmul.f32 %v621, 1.442695
  %v711 = vpow.pop %v710
  %v712 = vmul.f32 %v622, 1.442695
  %v713 = vpow.pop %v712
  %v714 = vmul.f32 %v623, 1.442695
  %v715 = vpow.pop %v714
  %v716 = vmul.f32 %v624, 1.442695
  %v717 = vpow.pop %v716
  %v718 = vmul.f32 %v625, 1.442695
  %v719 = vpow.pop %v718
  %v720 = vmul.f32 %v626, 1.442695
  %v721 = vpow.pop %v720
  %v722 = vmul.f32 %v627, 1.442695
  %v723 = vpow.pop %v722
  %v724 = vmul.f32 %v628, 1.442695
  %v725 = vpow.pop %v724
  %v726 = vmul.f32 %v629, 1.442695
  %v727 = vpow.pop %v726
  %v728 = vmul.f32 %v630, 1.442695
  %v729 = vpow.pop %v728
  %v730 = vmul.f32 %v631, 1.442695
  %v731 = vpow.pop %v730
  %v732 = vmul.f32 %v632, 1.442695
  %v733 = vpow.pop %v732
  %v734 = vmul.f32 %v633, 1.442695
  %v735 = vpow.pop %v734
  %v736 = vmul.f32 %v634, 1.442695
  %v737 = vpow.pop %v736
  %v738 = vmul.f32 %v635, 1.442695
  %v739 = vpow.pop %v738
  %v740 = vmul.f32 %v636, 1.442695
  %v741 = vpow.pop %v740
  %v742 = vmul.f32 %v637, 1.442695
  %v743 = vpow.pop %v742
  %v744 = vmul.f32 %v638, 1.442695
  %v745 = vpow.pop %v744
  %v746 = vmul.f32 %v639, 1.442695
  %v747 = vpow.pop %v746
  %v748 = vmul.f32 %v640, 1.442695
  %v749 = vpow.pop %v748
  %v750 = vmul.f32 %v641, 1.442695
  %v751 = vpow.pop %v750
  %v752 = vmul.f32 %v642, 1.442695
  %v753 = vpow.pop %v752
  %v754 = vmul.f32 %v643, 1.442695
  %v755 = vpow.pop %v754
  %v756 = vmul.f32 %v644, 1.442695
  %v757 = vpow.pop %v756
  %v758 = vmul.f32 %v645, 1.442695
  %v759 = vpow.pop %v758
  %v760 = vmul.f32 %v646, 1.442695
  %v761 = vpow.pop %v760
  %v762 = vmul.f32 %v647, 1.442695
  %v763 = vpow.pop %v762
  %v764 = vmul.f32 %v648, 1.442695
  %v765 = vpow.pop %v764
  %v766 = vmul.f32 %v649, 1.442695
  %v767 = vpow.pop %v766
  %v768 = vmul.f32 %v650, 1.442695
  %v769 = vpow.pop %v768
  %v770 = vmul.f32 %v651, 1.442695
  %v771 = vpow.pop %v770
  %v772 = vmul.f32 %v652, 1.442695
  %v773 = vpow.pop %v772
  %v774 = vmul.f32 %v653, 1.442695
  %v775 = vpow.pop %v774
  %v776 = vmul.f32 %v654, 1.442695
  %v777 = vpow.pop %v776
  %v778 = vmul.f32 %v655, 1.442695
  %v779 = vpow.pop %v778
  %v780 = vmul.f32 %v656, 1.442695
  %v781 = vpow.pop %v780
  %v782 = vmul.f32 %v657, 1.442695
  %v783 = vpow.pop %v782
  %v784 = vmul.f32 %v658, 1.442695
  %v785 = vpow.pop %v784
  %v786 = vmul.f32 %v659, 1.442695
  %v787 = vpow.pop %v786
  %v788 = vsel %vm339, %v661, 0.0
  %789 = vadd.xlane.f32.xlu0 %v788
  %v790 = vpop.xlane.xlu0 %789
  %v791 = vsel %vm339, %v663, 0.0
  %792 = vadd.xlane.f32.xlu0 %v791
  %v793 = vpop.xlane.xlu0 %792
  %v794 = vsel %vm339, %v665, 0.0
  %795 = vadd.xlane.f32.xlu0 %v794
  %v796 = vpop.xlane.xlu0 %795
  %v797 = vsel %vm339, %v667, 0.0
  %798 = vadd.xlane.f32.xlu0 %v797
  %v799 = vpop.xlane.xlu0 %798
  %v800 = vsel %vm339, %v669, 0.0
  %801 = vadd.xlane.f32.xlu0 %v800
  %v802 = vpop.xlane.xlu0 %801
  %v803 = vsel %vm339, %v671, 0.0
  %804 = vadd.xlane.f32.xlu0 %v803
  %v805 = vpop.xlane.xlu0 %804
  %v806 = vsel %vm339, %v673, 0.0
  %807 = vadd.xlane.f32.xlu0 %v806
  %v808 = vpop.xlane.xlu0 %807
  %v809 = vsel %vm339, %v675, 0.0
  %810 = vadd.xlane.f32.xlu0 %v809
  %v811 = vpop.xlane.xlu0 %810
  %v812 = vsel %vm339, %v677, 0.0
  %813 = vadd.xlane.f32.xlu0 %v812
  %v814 = vpop.xlane.xlu0 %813
  %v815 = vsel %vm339, %v679, 0.0
  %816 = vadd.xlane.f32.xlu0 %v815
  %v817 = vpop.xlane.xlu0 %816
  %v818 = vsel %vm339, %v681, 0.0
  %819 = vadd.xlane.f32.xlu0 %v818
  %v820 = vpop.xlane.xlu0 %819
  %v821 = vsel %vm339, %v683, 0.0
  %822 = vadd.xlane.f32.xlu0 %v821
  %v823 = vpop.xlane.xlu0 %822
  %v824 = vsel %vm339, %v685, 0.0
  %825 = vadd.xlane.f32.xlu0 %v824
  %v826 = vpop.xlane.xlu0 %825
  %v827 = vsel %vm339, %v687, 0.0
  %828 = vadd.xlane.f32.xlu0 %v827
  %v829 = vpop.xlane.xlu0 %828
  %v830 = vsel %vm339, %v689, 0.0
  %831 = vadd.xlane.f32.xlu0 %v830
  %v832 = vpop.xlane.xlu0 %831
  %v833 = vsel %vm339, %v691, 0.0
  %834 = vadd.xlane.f32.xlu0 %v833
  %v835 = vpop.xlane.xlu0 %834
  %v836 = vsel %vm339, %v693, 0.0
  %837 = vadd.xlane.f32.xlu0 %v836
  %v838 = vpop.xlane.xlu0 %837
  %v839 = vsel %vm339, %v695, 0.0
  %840 = vadd.xlane.f32.xlu0 %v839
  %v841 = vpop.xlane.xlu0 %840
  %v842 = vsel %vm339, %v697, 0.0
  %843 = vadd.xlane.f32.xlu0 %v842
  %v844 = vpop.xlane.xlu0 %843
  %v845 = vsel %vm339, %v699, 0.0
  %846 = vadd.xlane.f32.xlu0 %v845
  %v847 = vpop.xlane.xlu0 %846
  %v848 = vsel %vm339, %v701, 0.0
  %849 = vadd.xlane.f32.xlu0 %v848
  %v850 = vpop.xlane.xlu0 %849
  %v851 = vsel %vm339, %v703, 0.0
  %852 = vadd.xlane.f32.xlu0 %v851
  %v853 = vpop.xlane.xlu0 %852
  %v854 = vsel %vm339, %v705, 0.0
  %855 = vadd.xlane.f32.xlu0 %v854
  %v856 = vpop.xlane.xlu0 %855
  %v857 = vsel %vm339, %v707, 0.0
  %858 = vadd.xlane.f32.xlu0 %v857
  %v859 = vpop.xlane.xlu0 %858
  %v860 = vsel %vm339, %v709, 0.0
  %861 = vadd.xlane.f32.xlu0 %v860
  %v862 = vpop.xlane.xlu0 %861
  %v863 = vsel %vm339, %v711, 0.0
  %864 = vadd.xlane.f32.xlu0 %v863
  %v865 = vpop.xlane.xlu0 %864
  %v866 = vsel %vm339, %v713, 0.0
  %867 = vadd.xlane.f32.xlu0 %v866
  %v868 = vpop.xlane.xlu0 %867
  %v869 = vsel %vm339, %v715, 0.0
  %870 = vadd.xlane.f32.xlu0 %v869
  %v871 = vpop.xlane.xlu0 %870
  %v872 = vsel %vm339, %v717, 0.0
  %873 = vadd.xlane.f32.xlu0 %v872
  %v874 = vpop.xlane.xlu0 %873
  %v875 = vsel %vm339, %v719, 0.0
  %876 = vadd.xlane.f32.xlu0 %v875
  %v877 = vpop.xlane.xlu0 %876
  %v878 = vsel %vm339, %v721, 0.0
  %879 = vadd.xlane.f32.xlu0 %v878
  %v880 = vpop.xlane.xlu0 %879
  %v881 = vsel %vm339, %v723, 0.0
  %882 = vadd.xlane.f32.xlu0 %v881
  %v883 = vpop.xlane.xlu0 %882
  %v884 = vsel %vm339, %v725, 0.0
  %885 = vadd.xlane.f32.xlu0 %v884
  %v886 = vpop.xlane.xlu0 %885
  %v887 = vsel %vm339, %v727, 0.0
  %888 = vadd.xlane.f32.xlu0 %v887
  %v889 = vpop.xlane.xlu0 %888
  %v890 = vsel %vm339, %v729, 0.0
  %891 = vadd.xlane.f32.xlu0 %v890
  %v892 = vpop.xlane.xlu0 %891
  %v893 = vsel %vm339, %v731, 0.0
  %894 = vadd.xlane.f32.xlu0 %v893
  %v895 = vpop.xlane.xlu0 %894
  %v896 = vsel %vm339, %v733, 0.0
  %897 = vadd.xlane.f32.xlu0 %v896
  %v898 = vpop.xlane.xlu0 %897
  %v899 = vsel %vm339, %v735, 0.0
  %900 = vadd.xlane.f32.xlu0 %v899
  %v901 = vpop.xlane.xlu0 %900
  %v902 = vsel %vm339, %v737, 0.0
  %903 = vadd.xlane.f32.xlu0 %v902
  %v904 = vpop.xlane.xlu0 %903
  %v905 = vsel %vm339, %v739, 0.0
  %906 = vadd.xlane.f32.xlu0 %v905
  %v907 = vpop.xlane.xlu0 %906
  %v908 = vsel %vm339, %v741, 0.0
  %909 = vadd.xlane.f32.xlu0 %v908
  %v910 = vpop.xlane.xlu0 %909
  %v911 = vsel %vm339, %v743, 0.0
  %912 = vadd.xlane.f32.xlu0 %v911
  %v913 = vpop.xlane.xlu0 %912
  %v914 = vsel %vm339, %v745, 0.0
  %915 = vadd.xlane.f32.xlu0 %v914
  %v916 = vpop.xlane.xlu0 %915
  %v917 = vsel %vm339, %v747, 0.0
  %918 = vadd.xlane.f32.xlu0 %v917
  %v919 = vpop.xlane.xlu0 %918
  %v920 = vsel %vm339, %v749, 0.0
  %921 = vadd.xlane.f32.xlu0 %v920
  %v922 = vpop.xlane.xlu0 %921
  %v923 = vsel %vm339, %v751, 0.0
  %924 = vadd.xlane.f32.xlu0 %v923
  %v925 = vpop.xlane.xlu0 %924
  %v926 = vsel %vm339, %v753, 0.0
  %927 = vadd.xlane.f32.xlu0 %v926
  %v928 = vpop.xlane.xlu0 %927
  %v929 = vsel %vm339, %v755, 0.0
  %930 = vadd.xlane.f32.xlu0 %v929
  %v931 = vpop.xlane.xlu0 %930
  %v932 = vsel %vm339, %v757, 0.0
  %933 = vadd.xlane.f32.xlu0 %v932
  %v934 = vpop.xlane.xlu0 %933
  %v935 = vsel %vm339, %v759, 0.0
  %936 = vadd.xlane.f32.xlu0 %v935
  %v937 = vpop.xlane.xlu0 %936
  %v938 = vsel %vm339, %v761, 0.0
  %939 = vadd.xlane.f32.xlu0 %v938
  %v940 = vpop.xlane.xlu0 %939
  %v941 = vsel %vm339, %v763, 0.0
  %942 = vadd.xlane.f32.xlu0 %v941
  %v943 = vpop.xlane.xlu0 %942
  %v944 = vsel %vm339, %v765, 0.0
  %945 = vadd.xlane.f32.xlu0 %v944
  %v946 = vpop.xlane.xlu0 %945
  %v947 = vsel %vm339, %v767, 0.0
  %948 = vadd.xlane.f32.xlu0 %v947
  %v949 = vpop.xlane.xlu0 %948
  %v950 = vsel %vm339, %v769, 0.0
  %951 = vadd.xlane.f32.xlu0 %v950
  %v952 = vpop.xlane.xlu0 %951
  %v953 = vsel %vm339, %v771, 0.0
  %954 = vadd.xlane.f32.xlu0 %v953
  %v955 = vpop.xlane.xlu0 %954
  %v956 = vsel %vm339, %v773, 0.0
  %957 = vadd.xlane.f32.xlu0 %v956
  %v958 = vpop.xlane.xlu0 %957
  %v959 = vsel %vm339, %v775, 0.0
  %960 = vadd.xlane.f32.xlu0 %v959
  %v961 = vpop.xlane.xlu0 %960
  %v962 = vsel %vm339, %v777, 0.0
  %963 = vadd.xlane.f32.xlu0 %v962
  %v964 = vpop.xlane.xlu0 %963
  %v965 = vsel %vm339, %v779, 0.0
  %966 = vadd.xlane.f32.xlu0 %v965
  %v967 = vpop.xlane.xlu0 %966
  %v968 = vsel %vm339, %v781, 0.0
  %969 = vadd.xlane.f32.xlu0 %v968
  %v970 = vpop.xlane.xlu0 %969
  %v971 = vsel %vm339, %v783, 0.0
  %972 = vadd.xlane.f32.xlu0 %v971
  %v973 = vpop.xlane.xlu0 %972
  %v974 = vsel %vm339, %v785, 0.0
  %975 = vadd.xlane.f32.xlu0 %v974
  %v976 = vpop.xlane.xlu0 %975
  %v977 = vsel %vm339, %v787, 0.0
  %978 = vadd.xlane.f32.xlu0 %v977
  %v979 = vpop.xlane.xlu0 %978
  %v980 = vmul.f32 %v342, 0.5
  %v981 = vmul.f32 %v345, 0.5
  %v982 = vmul.f32 %v348, 0.5
  %v983 = vmul.f32 %v351, 0.5
  %v984 = vmul.f32 %v354, 0.5
  %v985 = vmul.f32 %v357, 0.5
  %v986 = vmul.f32 %v360, 0.5
  %v987 = vmul.f32 %v363, 0.5
  %v988 = vmul.f32 %v366, 0.5
  %v989 = vmul.f32 %v369, 0.5
  %v990 = vmul.f32 %v372, 0.5
  %v991 = vmul.f32 %v375, 0.5
  %v992 = vmul.f32 %v378, 0.5
  %v993 = vmul.f32 %v381, 0.5
  %v994 = vmul.f32 %v384, 0.5
  %v995 = vmul.f32 %v387, 0.5
  %v996 = vmul.f32 %v390, 0.5
  %v997 = vmul.f32 %v393, 0.5
  %v998 = vmul.f32 %v396, 0.5
  %v999 = vmul.f32 %v399, 0.5
  %v1000 = vmul.f32 %v402, 0.5
  %v1001 = vmul.f32 %v405, 0.5
  %v1002 = vmul.f32 %v408, 0.5
  %v1003 = vmul.f32 %v411, 0.5
  %v1004 = vmul.f32 %v414, 0.5
  %v1005 = vmul.f32 %v417, 0.5
  %v1006 = vmul.f32 %v420, 0.5
  %v1007 = vmul.f32 %v423, 0.5
  %v1008 = vmul.f32 %v426, 0.5
  %v1009 = vmul.f32 %v429, 0.5
  %v1010 = vmul.f32 %v432, 0.5
  %v1011 = vmul.f32 %v435, 0.5
  %v1012 = vmul.f32 %v438, 0.5
  %v1013 = vmul.f32 %v441, 0.5
  %v1014 = vmul.f32 %v444, 0.5
  %v1015 = vmul.f32 %v447, 0.5
  %v1016 = vmul.f32 %v450, 0.5
  %v1017 = vmul.f32 %v453, 0.5
  %v1018 = vmul.f32 %v456, 0.5
  %v1019 = vmul.f32 %v459, 0.5
  %v1020 = vmul.f32 %v462, 0.5
  %v1021 = vmul.f32 %v465, 0.5
  %v1022 = vmul.f32 %v468, 0.5
  %v1023 = vmul.f32 %v471, 0.5
  %v1024 = vmul.f32 %v474, 0.5
  %v1025 = vmul.f32 %v477, 0.5
  %v1026 = vmul.f32 %v480, 0.5
  %v1027 = vmul.f32 %v483, 0.5
  %v1028 = vmul.f32 %v486, 0.5
  %v1029 = vmul.f32 %v489, 0.5
  %v1030 = vmul.f32 %v492, 0.5
  %v1031 = vmul.f32 %v495, 0.5
  %v1032 = vmul.f32 %v498, 0.5
  %v1033 = vmul.f32 %v501, 0.5
  %v1034 = vmul.f32 %v504, 0.5
  %v1035 = vmul.f32 %v507, 0.5
  %v1036 = vmul.f32 %v510, 0.5
  %v1037 = vmul.f32 %v513, 0.5
  %v1038 = vmul.f32 %v516, 0.5
  %v1039 = vmul.f32 %v519, 0.5
  %v1040 = vmul.f32 %v522, 0.5
  %v1041 = vmul.f32 %v525, 0.5
  %v1042 = vmul.f32 %v528, 0.5
  %v1043 = vmul.f32 %v531, 0.5
  %v1044 = vlog2.pop %v790
  %v1045 = vmul.f32 %v1044, 0.6931472
  %v1046 = vlog2.pop %v793
  %v1047 = vmul.f32 %v1046, 0.6931472
  %v1048 = vlog2.pop %v796
  %v1049 = vmul.f32 %v1048, 0.6931472
  %v1050 = vlog2.pop %v799
  %v1051 = vmul.f32 %v1050, 0.6931472
  %v1052 = vlog2.pop %v802
  %v1053 = vmul.f32 %v1052, 0.6931472
  %v1054 = vlog2.pop %v805
  %v1055 = vmul.f32 %v1054, 0.6931472
  %v1056 = vlog2.pop %v808
  %v1057 = vmul.f32 %v1056, 0.6931472
  %v1058 = vlog2.pop %v811
  %v1059 = vmul.f32 %v1058, 0.6931472
  %v1060 = vlog2.pop %v814
  %v1061 = vmul.f32 %v1060, 0.6931472
  %v1062 = vlog2.pop %v817
  %v1063 = vmul.f32 %v1062, 0.6931472
  %v1064 = vlog2.pop %v820
  %v1065 = vmul.f32 %v1064, 0.6931472
  %v1066 = vlog2.pop %v823
  %v1067 = vmul.f32 %v1066, 0.6931472
  %v1068 = vlog2.pop %v826
  %v1069 = vmul.f32 %v1068, 0.6931472
  %v1070 = vlog2.pop %v829
  %v1071 = vmul.f32 %v1070, 0.6931472
  %v1072 = vlog2.pop %v832
  %v1073 = vmul.f32 %v1072, 0.6931472
  %v1074 = vlog2.pop %v835
  %v1075 = vmul.f32 %v1074, 0.6931472
  %v1076 = vlog2.pop %v838
  %v1077 = vmul.f32 %v1076, 0.6931472
  %v1078 = vlog2.pop %v841
  %v1079 = vmul.f32 %v1078, 0.6931472
  %v1080 = vlog2.pop %v844
  %v1081 = vmul.f32 %v1080, 0.6931472
  %v1082 = vlog2.pop %v847
  %v1083 = vmul.f32 %v1082, 0.6931472
  %v1084 = vlog2.pop %v850
  %v1085 = vmul.f32 %v1084, 0.6931472
  %v1086 = vlog2.pop %v853
  %v1087 = vmul.f32 %v1086, 0.6931472
  %v1088 = vlog2.pop %v856
  %v1089 = vmul.f32 %v1088, 0.6931472
  %v1090 = vlog2.pop %v859
  %v1091 = vmul.f32 %v1090, 0.6931472
  %v1092 = vlog2.pop %v862
  %v1093 = vmul.f32 %v1092, 0.6931472
  %v1094 = vlog2.pop %v865
  %v1095 = vmul.f32 %v1094, 0.6931472
  %v1096 = vlog2.pop %v868
  %v1097 = vmul.f32 %v1096, 0.6931472
  %v1098 = vlog2.pop %v871
  %v1099 = vmul.f32 %v1098, 0.6931472
  %v1100 = vlog2.pop %v874
  %v1101 = vmul.f32 %v1100, 0.6931472
  %v1102 = vlog2.pop %v877
  %v1103 = vmul.f32 %v1102, 0.6931472
  %v1104 = vlog2.pop %v880
  %v1105 = vmul.f32 %v1104, 0.6931472
  %v1106 = vlog2.pop %v883
  %v1107 = vmul.f32 %v1106, 0.6931472
  %v1108 = vlog2.pop %v886
  %v1109 = vmul.f32 %v1108, 0.6931472
  %v1110 = vlog2.pop %v889
  %v1111 = vmul.f32 %v1110, 0.6931472
  %v1112 = vlog2.pop %v892
  %v1113 = vmul.f32 %v1112, 0.6931472
  %v1114 = vlog2.pop %v895
  %v1115 = vmul.f32 %v1114, 0.6931472
  %v1116 = vlog2.pop %v898
  %v1117 = vmul.f32 %v1116, 0.6931472
  %v1118 = vlog2.pop %v901
  %v1119 = vmul.f32 %v1118, 0.6931472
  %v1120 = vlog2.pop %v904
  %v1121 = vmul.f32 %v1120, 0.6931472
  %v1122 = vlog2.pop %v907
  %v1123 = vmul.f32 %v1122, 0.6931472
  %v1124 = vlog2.pop %v910
  %v1125 = vmul.f32 %v1124, 0.6931472
  %v1126 = vlog2.pop %v913
  %v1127 = vmul.f32 %v1126, 0.6931472
  %v1128 = vlog2.pop %v916
  %v1129 = vmul.f32 %v1128, 0.6931472
  %v1130 = vlog2.pop %v919
  %v1131 = vmul.f32 %v1130, 0.6931472
  %v1132 = vlog2.pop %v922
  %v1133 = vmul.f32 %v1132, 0.6931472
  %v1134 = vlog2.pop %v925
  %v1135 = vmul.f32 %v1134, 0.6931472
  %v1136 = vlog2.pop %v928
  %v1137 = vmul.f32 %v1136, 0.6931472
  %v1138 = vlog2.pop %v931
  %v1139 = vmul.f32 %v1138, 0.6931472
  %v1140 = vlog2.pop %v934
  %v1141 = vmul.f32 %v1140, 0.6931472
  %v1142 = vlog2.pop %v937
  %v1143 = vmul.f32 %v1142, 0.6931472
  %v1144 = vlog2.pop %v940
  %v1145 = vmul.f32 %v1144, 0.6931472
  %v1146 = vlog2.pop %v943
  %v1147 = vmul.f32 %v1146, 0.6931472
  %v1148 = vlog2.pop %v946
  %v1149 = vmul.f32 %v1148, 0.6931472
  %v1150 = vlog2.pop %v949
  %v1151 = vmul.f32 %v1150, 0.6931472
  %v1152 = vlog2.pop %v952
  %v1153 = vmul.f32 %v1152, 0.6931472
  %v1154 = vlog2.pop %v955
  %v1155 = vmul.f32 %v1154, 0.6931472
  %v1156 = vlog2.pop %v958
  %v1157 = vmul.f32 %v1156, 0.6931472
  %v1158 = vlog2.pop %v961
  %v1159 = vmul.f32 %v1158, 0.6931472
  %v1160 = vlog2.pop %v964
  %v1161 = vmul.f32 %v1160, 0.6931472
  %v1162 = vlog2.pop %v967
  %v1163 = vmul.f32 %v1162, 0.6931472
  %v1164 = vlog2.pop %v970
  %v1165 = vmul.f32 %v1164, 0.6931472
  %v1166 = vlog2.pop %v973
  %v1167 = vmul.f32 %v1166, 0.6931472
  %v1168 = vlog2.pop %v976
  %v1169 = vmul.f32 %v1168, 0.6931472
  %v1170 = vlog2.pop %v979
  %v1171 = vmul.f32 %v1170, 0.6931472
  %v1172 = vadd.f32 %v980, %v1045
  %v1173 = vadd.f32 %v981, %v1047
  %v1174 = vadd.f32 %v982, %v1049
  %v1175 = vadd.f32 %v983, %v1051
  %v1176 = vadd.f32 %v984, %v1053
  %v1177 = vadd.f32 %v985, %v1055
  %v1178 = vadd.f32 %v986, %v1057
  %v1179 = vadd.f32 %v987, %v1059
  %v1180 = vadd.f32 %v988, %v1061
  %v1181 = vadd.f32 %v989, %v1063
  %v1182 = vadd.f32 %v990, %v1065
  %v1183 = vadd.f32 %v991, %v1067
  %v1184 = vadd.f32 %v992, %v1069
  %v1185 = vadd.f32 %v993, %v1071
  %v1186 = vadd.f32 %v994, %v1073
  %v1187 = vadd.f32 %v995, %v1075
  %v1188 = vadd.f32 %v996, %v1077
  %v1189 = vadd.f32 %v997, %v1079
  %v1190 = vadd.f32 %v998, %v1081
  %v1191 = vadd.f32 %v999, %v1083
  %v1192 = vadd.f32 %v1000, %v1085
  %v1193 = vadd.f32 %v1001, %v1087
  %v1194 = vadd.f32 %v1002, %v1089
  %v1195 = vadd.f32 %v1003, %v1091
  %v1196 = vadd.f32 %v1004, %v1093
  %v1197 = vadd.f32 %v1005, %v1095
  %v1198 = vadd.f32 %v1006, %v1097
  %v1199 = vadd.f32 %v1007, %v1099
  %v1200 = vadd.f32 %v1008, %v1101
  %v1201 = vadd.f32 %v1009, %v1103
  %v1202 = vadd.f32 %v1010, %v1105
  %v1203 = vadd.f32 %v1011, %v1107
  %v1204 = vadd.f32 %v1012, %v1109
  %v1205 = vadd.f32 %v1013, %v1111
  %v1206 = vadd.f32 %v1014, %v1113
  %v1207 = vadd.f32 %v1015, %v1115
  %v1208 = vadd.f32 %v1016, %v1117
  %v1209 = vadd.f32 %v1017, %v1119
  %v1210 = vadd.f32 %v1018, %v1121
  %v1211 = vadd.f32 %v1019, %v1123
  %v1212 = vadd.f32 %v1020, %v1125
  %v1213 = vadd.f32 %v1021, %v1127
  %v1214 = vadd.f32 %v1022, %v1129
  %v1215 = vadd.f32 %v1023, %v1131
  %v1216 = vadd.f32 %v1024, %v1133
  %v1217 = vadd.f32 %v1025, %v1135
  %v1218 = vadd.f32 %v1026, %v1137
  %v1219 = vadd.f32 %v1027, %v1139
  %v1220 = vadd.f32 %v1028, %v1141
  %v1221 = vadd.f32 %v1029, %v1143
  %v1222 = vadd.f32 %v1030, %v1145
  %v1223 = vadd.f32 %v1031, %v1147
  %v1224 = vadd.f32 %v1032, %v1149
  %v1225 = vadd.f32 %v1033, %v1151
  %v1226 = vadd.f32 %v1034, %v1153
  %v1227 = vadd.f32 %v1035, %v1155
  %v1228 = vadd.f32 %v1036, %v1157
  %v1229 = vadd.f32 %v1037, %v1159
  %v1230 = vadd.f32 %v1038, %v1161
  %v1231 = vadd.f32 %v1039, %v1163
  %v1232 = vadd.f32 %v1040, %v1165
  %v1233 = vadd.f32 %v1041, %v1167
  %v1234 = vadd.f32 %v1042, %v1169
  %v1235 = vadd.f32 %v1043, %v1171
  %1236 = vmatprep.subr.mxu0 0.0
  %1237 = vmatpush1.msra.mxu0 %v1187
  %1238 = vmatprep.subr.mxu0 0.0
  %1239 = vmatpush1.msra.mxu0 %v1186
  %1240 = vmatprep.subr.mxu0 0.0
  %1241 = vmatpush1.msra.mxu0 %v1185
  %1242 = vmatprep.subr.mxu0 0.0
  %1243 = vmatpush1.msra.mxu0 %v1184
  %1244 = vmatprep.subr.mxu0 0.0
  %1245 = vmatpush1.msra.mxu0 %v1183
  %1246 = vmatprep.subr.mxu0 0.0
  %1247 = vmatpush1.msra.mxu0 %v1182
  %1248 = vmatprep.subr.mxu0 0.0
  %1249 = vmatpush1.msra.mxu0 %v1181
  %1250 = vmatprep.subr.mxu0 0.0
  %1251 = vmatpush1.msra.mxu0 %v1180
  %1252 = vmatprep.subr.mxu0 0.0
  %1253 = vmatpush1.msra.mxu0 %v1179
  %1254 = vmatprep.subr.mxu0 0.0
  %1255 = vmatpush1.msra.mxu0 %v1178
  %1256 = vmatprep.subr.mxu0 0.0
  %1257 = vmatpush1.msra.mxu0 %v1177
  %1258 = vmatprep.subr.mxu0 0.0
  %1259 = vmatpush1.msra.mxu0 %v1176
  %1260 = vmatprep.subr.mxu0 0.0
  %1261 = vmatpush1.msra.mxu0 %v1175
  %1262 = vmatprep.subr.mxu0 0.0
  %1263 = vmatpush1.msra.mxu0 %v1174
  %1264 = vmatprep.subr.mxu0 0.0
  %1265 = vmatpush1.msra.mxu0 %v1173
  %1266 = vmatprep.subr.mxu0 0.0
  %1267 = vmatpush1.msra.mxu0 %v1172
  %1268 = vmatprep.subr.mxu0 0.0
  %1269 = vmatpush2.msra.mxu0 %v1203
  %1270 = vmatprep.subr.mxu0 0.0
  %1271 = vmatpush2.msra.mxu0 %v1202
  %1272 = vmatprep.subr.mxu0 0.0
  %1273 = vmatpush2.msra.mxu0 %v1201
  %1274 = vmatprep.subr.mxu0 0.0
  %1275 = vmatpush2.msra.mxu0 %v1200
  %1276 = vmatprep.subr.mxu0 0.0
  %1277 = vmatpush2.msra.mxu0 %v1199
  %1278 = vmatprep.subr.mxu0 0.0
  %1279 = vmatpush2.msra.mxu0 %v1198
  %1280 = vmatprep.subr.mxu0 0.0
  %1281 = vmatpush2.msra.mxu0 %v1197
  %1282 = vmatprep.subr.mxu0 0.0
  %1283 = vmatpush2.msra.mxu0 %v1196
  %1284 = vmatprep.subr.mxu0 0.0
  %1285 = vmatpush2.msra.mxu0 %v1195
  %1286 = vmatprep.subr.mxu0 0.0
  %1287 = vmatpush2.msra.mxu0 %v1194
  %1288 = vmatprep.subr.mxu0 0.0
  %1289 = vmatpush2.msra.mxu0 %v1193
  %1290 = vmatprep.subr.mxu0 0.0
  %1291 = vmatpush2.msra.mxu0 %v1192
  %1292 = vmatprep.subr.mxu0 0.0
  %1293 = vmatpush2.msra.mxu0 %v1191
  %1294 = vmatprep.subr.mxu0 0.0
  %1295 = vmatpush2.msra.mxu0 %v1190
  %1296 = vmatprep.subr.mxu0 0.0
  %1297 = vmatpush2.msra.mxu0 %v1189
  %1298 = vmatprep.subr.mxu0 0.0
  %1299 = vmatpush2.msra.mxu0 %v1188
  %1300 = vmatprep.mubr.f32.mxu0 %v148
  %1301 = vmatmul.mubr.f32.gmra.mxu0 %v147
  %v1302 = vpop.f32.mrf.mxu0
  %v1303 = vadd.f32 0.0, %v1302
  %v1304 = vpop.f32.mrf.mxu0
  %1305 = vmatprep.mubr.f32.mxu0 %v152
  %1306 = vmatmul.mubr.f32.gmra.mxu0 %v151
  %v1307 = vpop.f32.mrf.mxu0
  %v1308 = vadd.f32 0.0, %v1307
  %v1309 = vpop.f32.mrf.mxu0
  %1310 = vmatprep.mubr.f32.mxu0 %v156
  %1311 = vmatmul.mubr.f32.gmra.mxu0 %v155
  %v1312 = vpop.f32.mrf.mxu0
  %v1313 = vadd.f32 0.0, %v1312
  %v1314 = vpop.f32.mrf.mxu0
  %1315 = vdwg.mxu0
  %1316 = vmatprep.subr.mxu0 0.0
  %1317 = vmatpush1.msra.mxu0 %v1219
  %1318 = vmatprep.subr.mxu0 0.0
  %1319 = vmatpush1.msra.mxu0 %v1218
  %1320 = vmatprep.subr.mxu0 0.0
  %1321 = vmatpush1.msra.mxu0 %v1217
  %1322 = vmatprep.subr.mxu0 0.0
  %1323 = vmatpush1.msra.mxu0 %v1216
  %1324 = vmatprep.subr.mxu0 0.0
  %1325 = vmatpush1.msra.mxu0 %v1215
  %1326 = vmatprep.subr.mxu0 0.0
  %1327 = vmatpush1.msra.mxu0 %v1214
  %1328 = vmatprep.subr.mxu0 0.0
  %1329 = vmatpush1.msra.mxu0 %v1213
  %1330 = vmatprep.subr.mxu0 0.0
  %1331 = vmatpush1.msra.mxu0 %v1212
  %1332 = vmatprep.subr.mxu0 0.0
  %1333 = vmatpush1.msra.mxu0 %v1211
  %1334 = vmatprep.subr.mxu0 0.0
  %1335 = vmatpush1.msra.mxu0 %v1210
  %1336 = vmatprep.subr.mxu0 0.0
  %1337 = vmatpush1.msra.mxu0 %v1209
  %1338 = vmatprep.subr.mxu0 0.0
  %1339 = vmatpush1.msra.mxu0 %v1208
  %1340 = vmatprep.subr.mxu0 0.0
  %1341 = vmatpush1.msra.mxu0 %v1207
  %1342 = vmatprep.subr.mxu0 0.0
  %1343 = vmatpush1.msra.mxu0 %v1206
  %1344 = vmatprep.subr.mxu0 0.0
  %1345 = vmatpush1.msra.mxu0 %v1205
  %1346 = vmatprep.subr.mxu0 0.0
  %1347 = vmatpush1.msra.mxu0 %v1204
  %1348 = vmatprep.subr.mxu0 0.0
  %1349 = vmatpush2.msra.mxu0 %v1235
  %1350 = vmatprep.subr.mxu0 0.0
  %1351 = vmatpush2.msra.mxu0 %v1234
  %1352 = vmatprep.subr.mxu0 0.0
  %1353 = vmatpush2.msra.mxu0 %v1233
  %1354 = vmatprep.subr.mxu0 0.0
  %1355 = vmatpush2.msra.mxu0 %v1232
  %1356 = vmatprep.subr.mxu0 0.0
  %1357 = vmatpush2.msra.mxu0 %v1231
  %1358 = vmatprep.subr.mxu0 0.0
  %1359 = vmatpush2.msra.mxu0 %v1230
  %1360 = vmatprep.subr.mxu0 0.0
  %1361 = vmatpush2.msra.mxu0 %v1229
  %1362 = vmatprep.subr.mxu0 0.0
  %1363 = vmatpush2.msra.mxu0 %v1228
  %1364 = vmatprep.subr.mxu0 0.0
  %1365 = vmatpush2.msra.mxu0 %v1227
  %1366 = vmatprep.subr.mxu0 0.0
  %1367 = vmatpush2.msra.mxu0 %v1226
  %1368 = vmatprep.subr.mxu0 0.0
  %1369 = vmatpush2.msra.mxu0 %v1225
  %1370 = vmatprep.subr.mxu0 0.0
  %1371 = vmatpush2.msra.mxu0 %v1224
  %1372 = vmatprep.subr.mxu0 0.0
  %1373 = vmatpush2.msra.mxu0 %v1223
  %1374 = vmatprep.subr.mxu0 0.0
  %1375 = vmatpush2.msra.mxu0 %v1222
  %1376 = vmatprep.subr.mxu0 0.0
  %1377 = vmatpush2.msra.mxu0 %v1221
  %1378 = vmatprep.subr.mxu0 0.0
  %1379 = vmatpush2.msra.mxu0 %v1220
  %1380 = vmatprep.mubr.f32.mxu0 %v150
  %1381 = vmatmul.mubr.f32.gmra.mxu0 %v149
  %v1382 = vpop.f32.mrf.mxu0
  %v1383 = vadd.f32 %v1303, %v1382
  %v1384 = vpop.f32.mrf.mxu0
  %1385 = vmatprep.mubr.f32.mxu0 %v154
  %1386 = vmatmul.mubr.f32.gmra.mxu0 %v153
  %v1387 = vpop.f32.mrf.mxu0
  %v1388 = vadd.f32 %v1308, %v1387
  %v1389 = vpop.f32.mrf.mxu0
  %1390 = vmatprep.mubr.f32.mxu0 %v158
  %1391 = vmatmul.mubr.f32.gmra.mxu0 %v157
  %v1392 = vpop.f32.mrf.mxu0
  %v1393 = vadd.f32 %v1313, %v1392
  %v1394 = vpop.f32.mrf.mxu0
  %1395 = vdwg.mxu0
  %1396 = vst.msk [vmem:[%s2] sm:$0xff] %vm339, %v306
  %1397 = vst.msk [vmem:[%s2 + $0x8] sm:$0xff] %vm339, %v311
  %vm1398 = vcmask 149504
  %1399 = vst.msk [vmem:[%s2 + $0x10] sm:$0x7] %vm1398, %v316
  %vm1400 = vcmask 7168
  %1401 = vst.msk [vmem:[%s3] sm:$0xff] %vm1400, %v323
  %1402 = vst.msk [vmem:[%s3 + $0x8] sm:$0xff] %vm1400, %v328
  %vm1403 = vcmask 2048
  %1404 = vst.msk [vmem:[%s3 + $0x10] sm:$0x7] %vm1403, %v338
  %1405 = vst.msk [vmem:[%s4] sm:$0xff] %vm1400, %v1383
  %1406 = vst.msk [vmem:[%s4 + $0x8] sm:$0xff] %vm1400, %v1388
  %1407 = vst.msk [vmem:[%s4 + $0x10] sm:$0x7] %vm1403, %v1393
  // Predicated region
  $region10: #{tpu_custom_call.1} parent=0 // pred_check
    _
  $region11: #{tpu_custom_call.1} parent=0 // pred_check_branch
    %1409 = sbr.rel (0) target = $region13
  $region12: #{tpu_custom_call.1} parent=0 // pred_region
    _
  $region13: #{tpu_custom_call.1} parent=0 // pred_fallthru
    _
  // Predicated region
  $region14: #{tpu_custom_call.1} parent=0 // pred_check
    _
  $region15: #{tpu_custom_call.1} parent=0 // pred_check_branch
    %1411 = sbr.rel (0) target = $region17
  $region16: #{tpu_custom_call.1} parent=0 // pred_region
    _
  $region17: #{tpu_custom_call.1} parent=0 // pred_fallthru
    _
  // Predicated region
  $region18: #{tpu_custom_call.1} parent=0 // pred_check
    _
  $region19: #{tpu_custom_call.1} parent=0 // pred_check_branch
    %1413 = sbr.rel (0) target = $region21
  $region20: #{tpu_custom_call.1} parent=0 // pred_region
    _
  $region21: #{tpu_custom_call.1} parent=0 // pred_fallthru
    _
  // Predicated region
  $region22: #{tpu_custom_call.1} parent=0 // pred_check
    _
  $region23: #{tpu_custom_call.1} parent=0 // pred_check_branch
    %1415 = sbr.rel (0) target = $region25
  $region24: #{tpu_custom_call.1} parent=0 // pred_region
    _
  $region25: #{tpu_custom_call.1} parent=0 // pred_fallthru
    _
  // Predicated region
  $region26: #{tpu_custom_call.1} parent=0 // pred_check
    _
  $region27: #{tpu_custom_call.1} parent=0 // pred_check_branch
    %1417 = sbr.rel (0) target = $region29
  $region28: #{tpu_custom_call.1} parent=0 // pred_region
    _
  $region29: #{tpu_custom_call.1} parent=0 // pred_fallthru
    _
  // Predicated region
  $region30: #{tpu_custom_call.1} parent=0 // pred_check
    _
  $region31: #{tpu_custom_call.1} parent=0 // pred_check_branch
    %1419 = sbr.rel (0) target = $region33
  $region32: #{tpu_custom_call.1} parent=0 // pred_region
    _
  $region33: #{tpu_custom_call.1} parent=0 // pred_fallthru
    _

</llo_original>
